<compile_context>
chip_gen: v7x
topology: tpu7x:2x2x1
jax: 0.10.0
libtpu: 0.0.40
codegen_flags: <defaults>
</compile_context>

<pallas_src>
import functools

import jax
import jax.numpy as jnp
from jax.experimental import pallas as pl
from jax.experimental.pallas import tpu as pltpu


# ---------------------------------------------------------------------------
# Kernel bodies
# ---------------------------------------------------------------------------

def _basis_linear_vpu_kernel(w_ref, b_ref, o_ref, *, n_base):
    """Small-n_base path (n_base <= 8): sublane/lane-dense VPU FMAs.

    w_ref : SMEM [n_base, n_base] float32 (scalar reads)
    b_ref : VMEM [n_base, rows, 128]
    o_ref : VMEM [n_base, rows, 128]

    out[i] = sum_k w[i, k] * b[k]   (each b[k] is a dense [rows, 128] slab)
    """
    for i in range(n_base):                       # static unroll, n_base tiny
        acc = w_ref[i, 0] * b_ref[0].astype(jnp.float32)
        for k in range(1, n_base):
            acc = acc + w_ref[i, k] * b_ref[k].astype(jnp.float32)
        o_ref[i] = acc.astype(o_ref.dtype)


def _basis_linear_mxu_kernel(w_ref, b_ref, o_ref):
    """Larger-n_base path: single MXU matmul with f32 accumulation."""
    o_ref[...] = jnp.dot(
        w_ref[...], b_ref[...], preferred_element_type=jnp.float32
    ).astype(o_ref.dtype)


# ---------------------------------------------------------------------------
# Helpers
# ---------------------------------------------------------------------------

def _cdiv(a, b):
    return -(-a // b)


def _round_up(x, m):
    return _cdiv(x, m) * m


def _vmem_capacity_bytes():
    try:
        return int(pltpu.get_tpu_info().vmem_capacity_bytes)
    except Exception:
        return 64 << 20   # conservative (v7x per-TensorCore physical VMEM)


# ---------------------------------------------------------------------------
# Wrapper
# ---------------------------------------------------------------------------

def basis_linear_transform(
    weights,
    bases,
    *,
    target_tile_bytes=4 << 20,   # ~4 MiB of bases per grid step
    min_pallas_bytes=8 << 10,    # below this, let XLA fuse a plain dot
    force_pallas=False,
):
    """weights: [n_base, n_base], bases: [n_base, T] -> [n_base, T]."""
    n_base, n_base2 = weights.shape
    assert n_base == n_base2, "weights must be square"
    nb2, T = bases.shape
    assert nb2 == n_base, "bases first dim must equal n_base"

    out_dtype = bases.dtype
    itemsize = jnp.dtype(bases.dtype).itemsize

    # ---- Tiny problems (module's native 4x16): a standalone kernel launch is
    # pure overhead; let XLA fuse the matmul into the surrounding graph. ----
    if not force_pallas and n_base * T * itemsize < min_pallas_bytes:
        return jnp.dot(
            weights.astype(jnp.float32), bases.astype(jnp.float32)
        ).astype(out_dtype)

    # Generation-aware VMEM budget: ~7/16 of physical capacity (≈28 MiB on
    # v7x, ≈56 MiB on v5e/v6e), 4 MiB headroom for Mosaic internal scratch.
    vmem_phys = _vmem_capacity_bytes()
    vmem_cap = (vmem_phys * 7) // 16
    headroom = 4 << 20
    # Double-buffered input tile + output tile (same size) must fit under cap.
    tile_bytes = min(target_tile_bytes, max(64 << 10, (vmem_cap - headroom) // 4))

    lanes = 128

    if n_base <= 8:
        # ------------------------------------------------------------------
        # VPU path: [n_base, rows, 128] sublane/lane-dense slabs, weights in
        # SMEM read as scalars.  Mem-bound; MXU at <6% K occupancy is skipped.
        # ------------------------------------------------------------------
        T128 = _round_up(T, lanes)
        total_rows = T128 // lanes
        rows_target = max(8, (tile_bytes // (n_base * lanes * itemsize)) // 8 * 8)

        if total_rows <= rows_target:
            rows_tile = total_rows            # single tile; full-dim block OK
            num_tiles = 1
            t_pad = T128
        else:
            num_tiles = _cdiv(total_rows, rows_target)
            rows_tile = _round_up(_cdiv(total_rows, num_tiles), 8)
            t_pad = num_tiles * rows_tile * lanes

        # TODO(synk): padding copies the ragged tail through HBM; a masked
        # ragged last tile would avoid the extra traffic for very uneven T.
        b = bases if t_pad == T else jnp.pad(bases, ((0, 0), (0, t_pad - T)))
        b3 = b.reshape(n_base, t_pad // lanes, lanes)   # free view of rows

        tile_in_bytes = n_base * rows_tile * lanes * itemsize
        vmem_bytes = int(min(max(4 * tile_in_bytes + headroom, 2 << 20), vmem_cap))

        kernel = functools.partial(_basis_linear_vpu_kernel, n_base=n_base)
        out3 = pl.pallas_call(
            kernel,
            out_shape=jax.ShapeDtypeStruct((n_base, t_pad // lanes, lanes), out_dtype),
            grid=(num_tiles,),
            in_specs=[
                # Tiny weights: scalars in SMEM, no vector broadcast / DMA churn.
                pl.BlockSpec(memory_space=pltpu.MemorySpace.SMEM),
                pl.BlockSpec((n_base, rows_tile, lanes), lambda i: (0, i, 0)),
            ],
            out_specs=pl.BlockSpec((n_base, rows_tile, lanes), lambda i: (0, i, 0)),
            compiler_params=pltpu.CompilerParams(
                # TODO(synk): if profiling on v7x shows one TensorCore idle,
                # switch this axis to pltpu.CORE_PARALLEL (plain "parallel"
                # may not split the grid across the two TCs).
                dimension_semantics=("parallel",),
                vmem_limit_bytes=vmem_bytes,
            ),
        )(weights.astype(jnp.float32), b3)

        out = out3.reshape(n_base, t_pad)
        return out[:, :T] if t_pad != T else out

    # ----------------------------------------------------------------------
    # MXU path (n_base > 8): 2-D lane-dense tiles, weights resident in VMEM.
    # ----------------------------------------------------------------------
    T128 = _round_up(T, lanes)
    tile_t_target = max(lanes, (tile_bytes // (n_base * itemsize)) // lanes * lanes)

    if T128 <= tile_t_target:
        tile_t = T128
        num_tiles = 1
        t_pad = T128
    else:
        num_tiles = _cdiv(T128, tile_t_target)
        tile_t = _round_up(_cdiv(T128, num_tiles), lanes)
        t_pad = num_tiles * tile_t

    b = bases if t_pad == T else jnp.pad(bases, ((0, 0), (0, t_pad - T)))

    tile_in_bytes = n_base * tile_t * itemsize
    w_bytes = n_base * n_base * itemsize
    vmem_bytes = int(min(max(2 * w_bytes + 4 * tile_in_bytes + headroom, 2 << 20),
                         vmem_cap))

    out = pl.pallas_call(
        _basis_linear_mxu_kernel,
        out_shape=jax.ShapeDtypeStruct((n_base, t_pad), out_dtype),
        grid=(num_tiles,),
        in_specs=[
            pl.BlockSpec((n_base, n_base), lambda i: (0, 0)),   # weights resident
            pl.BlockSpec((n_base, tile_t), lambda i: (0, i)),   # lane-dense tile
        ],
        out_specs=pl.BlockSpec((n_base, tile_t), lambda i: (0, i)),
        compiler_params=pltpu.CompilerParams(
            dimension_semantics=("parallel",),
            vmem_limit_bytes=vmem_bytes,
        ),
    )(weights, b)

    return out[:, :T] if t_pad != T else out


# ---------------------------------------------------------------------------
# Demo / correctness check
# ---------------------------------------------------------------------------

if __name__ == "__main__":
    key = jax.random.PRNGKey(0)
    k0, k1, k2, k3, k4, k5, k6, k7 = jax.random.split(key, 8)

    # 1) Module-native shape (n_base=4, T=16): tiny -> fused jnp.dot fallback
    #    by default, and once forced through the Pallas path for validation.
    w_small = jax.random.normal(k0, (4, 4), dtype=jnp.float32)
    b_small = jax.random.normal(k1, (4, 16), dtype=jnp.float32)
    out_small = jax.block_until_ready(basis_linear_transform(w_small, b_small))
    assert out_small.shape == (4, 16)
    assert jnp.allclose(out_small, w_small @ b_small, atol=1e-5, rtol=1e-5)

    out_small_p = jax.block_until_ready(
        basis_linear_transform(w_small, b_small, force_pallas=True)
    )
    assert out_small_p.shape == (4, 16)
    assert jnp.allclose(out_small_p, w_small @ b_small, atol=1e-5, rtol=1e-5)

    # 2) Lane-aligned T, multi-tile VPU path (small target tile forces a grid).
    w_med = jax.random.normal(k2, (4, 4), dtype=jnp.float32)
    b_med = jax.random.normal(k3, (4, 8192), dtype=jnp.float32)
    out_med = jax.block_until_ready(
        basis_linear_transform(w_med, b_med, target_tile_bytes=32 << 10)
    )
    assert out_med.shape == (4, 8192)
    assert jnp.allclose(out_med, w_med @ b_med, atol=1e-4, rtol=1e-4)

    # 3) Non-lane-aligned T -> padded tiled path (no all-in-VMEM fallback).
    w_rag = jax.random.normal(k4, (4, 4), dtype=jnp.float32)
    b_rag = jax.random.normal(k5, (4, 1000), dtype=jnp.float32)
    out_rag = jax.block_until_ready(basis_linear_transform(w_rag, b_rag))
    assert out_rag.shape == (4, 1000)
    assert jnp.allclose(out_rag, w_rag @ b_rag, atol=1e-4, rtol=1e-4)

    # 4) Larger n_base -> MXU kernel path.
    w_big = jax.random.normal(k6, (16, 16), dtype=jnp.float32)
    b_big = jax.random.normal(k7, (16, 640), dtype=jnp.float32)
    out_big = jax.block_until_ready(basis_linear_transform(w_big, b_big))
    assert out_big.shape == (16, 640)
    assert jnp.allclose(out_big, w_big @ b_big, atol=1e-4, rtol=1e-4)

    print("KERNEL_OK")
</pallas_src>

<mosaic_0001>
module attributes {stable_mosaic.version = 11 : i64} {
  func.func @_basis_linear_vpu_kernel(%arg0: i32, %arg1: memref<4x4xf32, #tpu.memory_space<smem>>, %arg2: memref<4x1x128xf32, #tpu.memory_space<vmem>>, %arg3: memref<4x1x128xf32, #tpu.memory_space<vmem>>) attributes {dimension_semantics = [#tpu.dimension_semantics<parallel>], iteration_bounds = array<i64: 1>, scalar_prefetch = 0 : i64, scratch_operands = 0 : i64, tpu.core_type = #tpu.core_type<tc>, window_params = [{transform_indices = @transform_0, window_bounds = array<i64: 4, 4>}, {transform_indices = @transform_1, window_bounds = array<i64: 4, 1, 128>}, {transform_indices = @transform_2, window_bounds = array<i64: 4, 1, 128>}]} {
    %c0 = arith.constant 0 : index
    %c0_0 = arith.constant 0 : index
    %0 = memref.load %arg1[%c0, %c0_0] : memref<4x4xf32, #tpu.memory_space<smem>>
    %c0_1 = arith.constant 0 : index
    %c0_2 = arith.constant 0 : index
    %c0_3 = arith.constant 0 : index
    %1 = vector.load %arg2[%c0_1, %c0_2, %c0_3] : memref<4x1x128xf32, #tpu.memory_space<vmem>>, vector<1x1x128xf32>
    %2 = vector.shape_cast %1 : vector<1x1x128xf32> to vector<1x128xf32>
    %3 = vector.broadcast %0 : f32 to vector<1x128xf32>
    %4 = arith.mulf %3, %2 : vector<1x128xf32>
    %c0_4 = arith.constant 0 : index
    %c1 = arith.constant 1 : index
    %5 = memref.load %arg1[%c0_4, %c1] : memref<4x4xf32, #tpu.memory_space<smem>>
    %c1_5 = arith.constant 1 : index
    %c0_6 = arith.constant 0 : index
    %c0_7 = arith.constant 0 : index
    %6 = vector.load %arg2[%c1_5, %c0_6, %c0_7] : memref<4x1x128xf32, #tpu.memory_space<vmem>>, vector<1x1x128xf32>
    %7 = vector.shape_cast %6 : vector<1x1x128xf32> to vector<1x128xf32>
    %8 = vector.broadcast %5 : f32 to vector<1x128xf32>
    %9 = arith.mulf %8, %7 : vector<1x128xf32>
    %10 = arith.addf %4, %9 : vector<1x128xf32>
    %c0_8 = arith.constant 0 : index
    %c2 = arith.constant 2 : index
    %11 = memref.load %arg1[%c0_8, %c2] : memref<4x4xf32, #tpu.memory_space<smem>>
    %c2_9 = arith.constant 2 : index
    %c0_10 = arith.constant 0 : index
    %c0_11 = arith.constant 0 : index
    %12 = vector.load %arg2[%c2_9, %c0_10, %c0_11] : memref<4x1x128xf32, #tpu.memory_space<vmem>>, vector<1x1x128xf32>
    %13 = vector.shape_cast %12 : vector<1x1x128xf32> to vector<1x128xf32>
    %14 = vector.broadcast %11 : f32 to vector<1x128xf32>
    %15 = arith.mulf %14, %13 : vector<1x128xf32>
    %16 = arith.addf %10, %15 : vector<1x128xf32>
    %c0_12 = arith.constant 0 : index
    %c3 = arith.constant 3 : index
    %17 = memref.load %arg1[%c0_12, %c3] : memref<4x4xf32, #tpu.memory_space<smem>>
    %c3_13 = arith.constant 3 : index
    %c0_14 = arith.constant 0 : index
    %c0_15 = arith.constant 0 : index
    %18 = vector.load %arg2[%c3_13, %c0_14, %c0_15] : memref<4x1x128xf32, #tpu.memory_space<vmem>>, vector<1x1x128xf32>
    %19 = vector.shape_cast %18 : vector<1x1x128xf32> to vector<1x128xf32>
    %20 = vector.broadcast %17 : f32 to vector<1x128xf32>
    %21 = arith.mulf %20, %19 : vector<1x128xf32>
    %22 = arith.addf %16, %21 : vector<1x128xf32>
    %c0_16 = arith.constant 0 : index
    %c0_17 = arith.constant 0 : index
    %c0_18 = arith.constant 0 : index
    %23 = vector.load %arg3[%c0_16, %c0_17, %c0_18] : memref<4x1x128xf32, #tpu.memory_space<vmem>>, vector<1x1x128xf32>
    %24 = vector.shape_cast %23 : vector<1x1x128xf32> to vector<1x128xf32>
    %25 = vector.shape_cast %22 : vector<1x128xf32> to vector<1x1x128xf32>
    tpu.vector_store %arg3[%c0_16, %c0_17, %c0_18], %25 {strides = array<i32>} : memref<4x1x128xf32, #tpu.memory_space<vmem>>, vector<1x1x128xf32>,
    %c1_19 = arith.constant 1 : index
    %c0_20 = arith.constant 0 : index
    %26 = memref.load %arg1[%c1_19, %c0_20] : memref<4x4xf32, #tpu.memory_space<smem>>
    %c0_21 = arith.constant 0 : index
    %c0_22 = arith.constant 0 : index
    %c0_23 = arith.constant 0 : index
    %27 = vector.load %arg2[%c0_21, %c0_22, %c0_23] : memref<4x1x128xf32, #tpu.memory_space<vmem>>, vector<1x1x128xf32>
    %28 = vector.shape_cast %27 : vector<1x1x128xf32> to vector<1x128xf32>
    %29 = vector.broadcast %26 : f32 to vector<1x128xf32>
    %30 = arith.mulf %29, %28 : vector<1x128xf32>
    %c1_24 = arith.constant 1 : index
    %c1_25 = arith.constant 1 : index
    %31 = memref.load %arg1[%c1_24, %c1_25] : memref<4x4xf32, #tpu.memory_space<smem>>
    %c1_26 = arith.constant 1 : index
    %c0_27 = arith.constant 0 : index
    %c0_28 = arith.constant 0 : index
    %32 = vector.load %arg2[%c1_26, %c0_27, %c0_28] : memref<4x1x128xf32, #tpu.memory_space<vmem>>, vector<1x1x128xf32>
    %33 = vector.shape_cast %32 : vector<1x1x128xf32> to vector<1x128xf32>
    %34 = vector.broadcast %31 : f32 to vector<1x128xf32>
    %35 = arith.mulf %34, %33 : vector<1x128xf32>
    %36 = arith.addf %30, %35 : vector<1x128xf32>
    %c1_29 = arith.constant 1 : index
    %c2_30 = arith.constant 2 : index
    %37 = memref.load %arg1[%c1_29, %c2_30] : memref<4x4xf32, #tpu.memory_space<smem>>
    %c2_31 = arith.constant 2 : index
    %c0_32 = arith.constant 0 : index
    %c0_33 = arith.constant 0 : index
    %38 = vector.load %arg2[%c2_31, %c0_32, %c0_33] : memref<4x1x128xf32, #tpu.memory_space<vmem>>, vector<1x1x128xf32>
    %39 = vector.shape_cast %38 : vector<1x1x128xf32> to vector<1x128xf32>
    %40 = vector.broadcast %37 : f32 to vector<1x128xf32>
    %41 = arith.mulf %40, %39 : vector<1x128xf32>
    %42 = arith.addf %36, %41 : vector<1x128xf32>
    %c1_34 = arith.constant 1 : index
    %c3_35 = arith.constant 3 : index
    %43 = memref.load %arg1[%c1_34, %c3_35] : memref<4x4xf32, #tpu.memory_space<smem>>
    %c3_36 = arith.constant 3 : index
    %c0_37 = arith.constant 0 : index
    %c0_38 = arith.constant 0 : index
    %44 = vector.load %arg2[%c3_36, %c0_37, %c0_38] : memref<4x1x128xf32, #tpu.memory_space<vmem>>, vector<1x1x128xf32>
    %45 = vector.shape_cast %44 : vector<1x1x128xf32> to vector<1x128xf32>
    %46 = vector.broadcast %43 : f32 to vector<1x128xf32>
    %47 = arith.mulf %46, %45 : vector<1x128xf32>
    %48 = arith.addf %42, %47 : vector<1x128xf32>
    %c1_39 = arith.constant 1 : index
    %c0_40 = arith.constant 0 : index
    %c0_41 = arith.constant 0 : index
    %49 = vector.load %arg3[%c1_39, %c0_40, %c0_41] : memref<4x1x128xf32, #tpu.memory_space<vmem>>, vector<1x1x128xf32>
    %50 = vector.shape_cast %49 : vector<1x1x128xf32> to vector<1x128xf32>
    %51 = vector.shape_cast %48 : vector<1x128xf32> to vector<1x1x128xf32>
    tpu.vector_store %arg3[%c1_39, %c0_40, %c0_41], %51 {strides = array<i32>} : memref<4x1x128xf32, #tpu.memory_space<vmem>>, vector<1x1x128xf32>,
    %c2_42 = arith.constant 2 : index
    %c0_43 = arith.constant 0 : index
    %52 = memref.load %arg1[%c2_42, %c0_43] : memref<4x4xf32, #tpu.memory_space<smem>>
    %c0_44 = arith.constant 0 : index
    %c0_45 = arith.constant 0 : index
    %c0_46 = arith.constant 0 : index
    %53 = vector.load %arg2[%c0_44, %c0_45, %c0_46] : memref<4x1x128xf32, #tpu.memory_space<vmem>>, vector<1x1x128xf32>
    %54 = vector.shape_cast %53 : vector<1x1x128xf32> to vector<1x128xf32>
    %55 = vector.broadcast %52 : f32 to vector<1x128xf32>
    %56 = arith.mulf %55, %54 : vector<1x128xf32>
    %c2_47 = arith.constant 2 : index
    %c1_48 = arith.constant 1 : index
    %57 = memref.load %arg1[%c2_47, %c1_48] : memref<4x4xf32, #tpu.memory_space<smem>>
    %c1_49 = arith.constant 1 : index
    %c0_50 = arith.constant 0 : index
    %c0_51 = arith.constant 0 : index
    %58 = vector.load %arg2[%c1_49, %c0_50, %c0_51] : memref<4x1x128xf32, #tpu.memory_space<vmem>>, vector<1x1x128xf32>
    %59 = vector.shape_cast %58 : vector<1x1x128xf32> to vector<1x128xf32>
    %60 = vector.broadcast %57 : f32 to vector<1x128xf32>
    %61 = arith.mulf %60, %59 : vector<1x128xf32>
    %62 = arith.addf %56, %61 : vector<1x128xf32>
    %c2_52 = arith.constant 2 : index
    %c2_53 = arith.constant 2 : index
    %63 = memref.load %arg1[%c2_52, %c2_53] : memref<4x4xf32, #tpu.memory_space<smem>>
    %c2_54 = arith.constant 2 : index
    %c0_55 = arith.constant 0 : index
    %c0_56 = arith.constant 0 : index
    %64 = vector.load %arg2[%c2_54, %c0_55, %c0_56] : memref<4x1x128xf32, #tpu.memory_space<vmem>>, vector<1x1x128xf32>
    %65 = vector.shape_cast %64 : vector<1x1x128xf32> to vector<1x128xf32>
    %66 = vector.broadcast %63 : f32 to vector<1x128xf32>
    %67 = arith.mulf %66, %65 : vector<1x128xf32>
    %68 = arith.addf %62, %67 : vector<1x128xf32>
    %c2_57 = arith.constant 2 : index
    %c3_58 = arith.constant 3 : index
    %69 = memref.load %arg1[%c2_57, %c3_58] : memref<4x4xf32, #tpu.memory_space<smem>>
    %c3_59 = arith.constant 3 : index
    %c0_60 = arith.constant 0 : index
    %c0_61 = arith.constant 0 : index
    %70 = vector.load %arg2[%c3_59, %c0_60, %c0_61] : memref<4x1x128xf32, #tpu.memory_space<vmem>>, vector<1x1x128xf32>
    %71 = vector.shape_cast %70 : vector<1x1x128xf32> to vector<1x128xf32>
    %72 = vector.broadcast %69 : f32 to vector<1x128xf32>
    %73 = arith.mulf %72, %71 : vector<1x128xf32>
    %74 = arith.addf %68, %73 : vector<1x128xf32>
    %c2_62 = arith.constant 2 : index
    %c0_63 = arith.constant 0 : index
    %c0_64 = arith.constant 0 : index
    %75 = vector.load %arg3[%c2_62, %c0_63, %c0_64] : memref<4x1x128xf32, #tpu.memory_space<vmem>>, vector<1x1x128xf32>
    %76 = vector.shape_cast %75 : vector<1x1x128xf32> to vector<1x128xf32>
    %77 = vector.shape_cast %74 : vector<1x128xf32> to vector<1x1x128xf32>
    tpu.vector_store %arg3[%c2_62, %c0_63, %c0_64], %77 {strides = array<i32>} : memref<4x1x128xf32, #tpu.memory_space<vmem>>, vector<1x1x128xf32>,
    %c3_65 = arith.constant 3 : index
    %c0_66 = arith.constant 0 : index
    %78 = memref.load %arg1[%c3_65, %c0_66] : memref<4x4xf32, #tpu.memory_space<smem>>
    %c0_67 = arith.constant 0 : index
    %c0_68 = arith.constant 0 : index
    %c0_69 = arith.constant 0 : index
    %79 = vector.load %arg2[%c0_67, %c0_68, %c0_69] : memref<4x1x128xf32, #tpu.memory_space<vmem>>, vector<1x1x128xf32>
    %80 = vector.shape_cast %79 : vector<1x1x128xf32> to vector<1x128xf32>
    %81 = vector.broadcast %78 : f32 to vector<1x128xf32>
    %82 = arith.mulf %81, %80 : vector<1x128xf32>
    %c3_70 = arith.constant 3 : index
    %c1_71 = arith.constant 1 : index
    %83 = memref.load %arg1[%c3_70, %c1_71] : memref<4x4xf32, #tpu.memory_space<smem>>
    %c1_72 = arith.constant 1 : index
    %c0_73 = arith.constant 0 : index
    %c0_74 = arith.constant 0 : index
    %84 = vector.load %arg2[%c1_72, %c0_73, %c0_74] : memref<4x1x128xf32, #tpu.memory_space<vmem>>, vector<1x1x128xf32>
    %85 = vector.shape_cast %84 : vector<1x1x128xf32> to vector<1x128xf32>
    %86 = vector.broadcast %83 : f32 to vector<1x128xf32>
    %87 = arith.mulf %86, %85 : vector<1x128xf32>
    %88 = arith.addf %82, %87 : vector<1x128xf32>
    %c3_75 = arith.constant 3 : index
    %c2_76 = arith.constant 2 : index
    %89 = memref.load %arg1[%c3_75, %c2_76] : memref<4x4xf32, #tpu.memory_space<smem>>
    %c2_77 = arith.constant 2 : index
    %c0_78 = arith.constant 0 : index
    %c0_79 = arith.constant 0 : index
    %90 = vector.load %arg2[%c2_77, %c0_78, %c0_79] : memref<4x1x128xf32, #tpu.memory_space<vmem>>, vector<1x1x128xf32>
    %91 = vector.shape_cast %90 : vector<1x1x128xf32> to vector<1x128xf32>
    %92 = vector.broadcast %89 : f32 to vector<1x128xf32>
    %93 = arith.mulf %92, %91 : vector<1x128xf32>
    %94 = arith.addf %88, %93 : vector<1x128xf32>
    %c3_80 = arith.constant 3 : index
    %c3_81 = arith.constant 3 : index
    %95 = memref.load %arg1[%c3_80, %c3_81] : memref<4x4xf32, #tpu.memory_space<smem>>
    %c3_82 = arith.constant 3 : index
    %c0_83 = arith.constant 0 : index
    %c0_84 = arith.constant 0 : index
    %96 = vector.load %arg2[%c3_82, %c0_83, %c0_84] : memref<4x1x128xf32, #tpu.memory_space<vmem>>, vector<1x1x128xf32>
    %97 = vector.shape_cast %96 : vector<1x1x128xf32> to vector<1x128xf32>
    %98 = vector.broadcast %95 : f32 to vector<1x128xf32>
    %99 = arith.mulf %98, %97 : vector<1x128xf32>
    %100 = arith.addf %94, %99 : vector<1x128xf32>
    %c3_85 = arith.constant 3 : index
    %c0_86 = arith.constant 0 : index
    %c0_87 = arith.constant 0 : index
    %101 = vector.load %arg3[%c3_85, %c0_86, %c0_87] : memref<4x1x128xf32, #tpu.memory_space<vmem>>, vector<1x1x128xf32>
    %102 = vector.shape_cast %101 : vector<1x1x128xf32> to vector<1x128xf32>
    %103 = vector.shape_cast %100 : vector<1x128xf32> to vector<1x1x128xf32>
    tpu.vector_store %arg3[%c3_85, %c0_86, %c0_87], %103 {strides = array<i32>} : memref<4x1x128xf32, #tpu.memory_space<vmem>>, vector<1x1x128xf32>,
    return
  }
  func.func @transform_0(%arg0: i32) -> (i32, i32) {
    %c0_i32 = arith.constant 0 : i32
    %c0_i32_0 = arith.constant 0 : i32
    %c0_i32_1 = arith.constant 0 : i32
    return %c0_i32, %c0_i32_0 : i32, i32
  }
  func.func @transform_1(%arg0: i32) -> (i32, i32, i32) {
    %c0_i32 = arith.constant 0 : i32
    %c0_i32_0 = arith.constant 0 : i32
    %c0_i32_1 = arith.constant 0 : i32
    return %c0_i32, %arg0, %c0_i32_0 : i32, i32, i32
  }
  func.func @transform_2(%arg0: i32) -> (i32, i32, i32) {
    %c0_i32 = arith.constant 0 : i32
    %c0_i32_0 = arith.constant 0 : i32
    %c0_i32_1 = arith.constant 0 : i32
    return %c0_i32, %arg0, %c0_i32_0 : i32, i32, i32
  }
}

</mosaic_0001>

<llo_original>
// kernel: tpu_custom_call.1
$region0: #{tpu_custom_call.1}
  #allocation0 [shape = 'u32[]', space=smem, size = 0x4, offset = 0x4, fixed_abs, tag = 'smem constant byte address 0x4 - core index']
  #allocation1 [shape = 'u32[144,128]{1,0:T(1,128)}', space=vmem, size = 0x12000, scoped, tag = 'internal scratch']
  %s0 = inlined_call_operand.hbm [shape: f32[4,4], index: 0, kind: input, shape index: {}]
  %s1 = inlined_call_operand.hbm [shape: f32[4,1,128], index: 1, kind: input, shape index: {}]
  %s2 = inlined_call_operand.hbm [shape: f32[4,1,128], index: 2, kind: output, shape index: {}]
  %s3 = sld [smem:[#allocation0]]
  $region26: #{tpu_custom_call.1} parent=0
    _
  %s5 = ssub.s32 1, %s3
  %s6 = scalar_select 0, %s5, %s3
  $region1: #{tpu_custom_call.1} parent=0
    #allocation2 [shape = 'u8[2048]{0}', space=smem, size = 0x800, scoped, tag = 'input window, operand 0, single buffered']
    #allocation3 [shape = 's32[1]{0}', space=sflag, size = 0x4, scoped, tag = 'scoped memory for tpu_custom_call.1']
    #allocation4 [shape = 's32[1]{0}', space=sflag, size = 0x4, scoped, tag = 'scoped memory for tpu_custom_call.1']
    #allocation5 [shape = 's32[1]{0}', space=sflag, size = 0x4, scoped, tag = 'scoped memory for tpu_custom_call.1']
    #allocation6 [shape = 'u8[2048]{0}', space=vmem, size = 0x800, scoped, tag = 'input window, operand 1, single buffered']
    #allocation7 [shape = 'u8[2048]{0}', space=vmem, size = 0x800, scoped, tag = 'output window, operand 0, single buffered']
    %7 = vsyncpa [#allocation5], 0
    %8 = vsyncpa [#allocation3], 0
    %9 = vsyncpa [#allocation4], 0
    // Predicated region
    $region2: #{tpu_custom_call.1} parent=1 // pred_check
      _
    $region3: #{tpu_custom_call.1} parent=1 // pred_check_branch
      %11 = sbr.rel (0) target = $region5
    $region4: #{tpu_custom_call.1} parent=1 // pred_region
      %s13 = ssub.s32 64, 64
      %14 = vsyncadd [#allocation5], %s13
      %17 = dma.hbm_to_smem %s0, 64, [#allocation2], [#allocation5]
    $region5: #{tpu_custom_call.1} parent=1 // pred_fallthru
      _
    // Predicated region
    $region6: #{tpu_custom_call.1} parent=1 // pred_check
      _
    $region7: #{tpu_custom_call.1} parent=1 // pred_check_branch
      %19 = sbr.rel (0) target = $region9
    $region8: #{tpu_custom_call.1} parent=1 // pred_region
      %s21 = ssub.s32 64, 64
      %22 = vsyncadd [#allocation3], %s21
      %s23 = sshll.u32 [#allocation6], 4
      %s24 = int_to_ptr.vmem [resolvable:$true] %s23
      %29 = dma.hbm_to_vmem [thread:$0]  %s1, 64, %s24, [#allocation3], 16, 16, 1
    $region9: #{tpu_custom_call.1} parent=1 // pred_fallthru
      _
    // Predicated region
    $region10: #{tpu_custom_call.1} parent=1 // pred_check
      _
    $region11: #{tpu_custom_call.1} parent=1 // pred_check_branch
      %31 = sbr.rel (0) target = $region13
    $region12: #{tpu_custom_call.1} parent=1 // pred_region
      %32 = dma.done [#allocation5], 64
    $region13: #{tpu_custom_call.1} parent=1 // pred_fallthru
      _
    // Predicated region
    $region14: #{tpu_custom_call.1} parent=1 // pred_check
      _
    $region15: #{tpu_custom_call.1} parent=1 // pred_check_branch
      %34 = sbr.rel (0) target = $region17
    $region16: #{tpu_custom_call.1} parent=1 // pred_region
      %35 = dma.done [#allocation3], 64
    $region17: #{tpu_custom_call.1} parent=1 // pred_fallthru
      _
    %36 = sfence
    %s37 = sld [smem:[#allocation2]]
    %v38 = vld [vmem:[#allocation6] sm:$0x1]
    %v39 = vstv %s37
    %v40 = vmul.f32 %v39, %v38
    %s41 = sld [smem:[#allocation2 + $0x1]]
    %s42 = scalar_lea.vmem [#allocation6], 1
    %v43 = vld [vmem:[%s42] sm:$0x1]
    %v44 = vstv %s41
    %v45 = vmul.f32 %v44, %v43
    %v46 = vadd.f32 %v40, %v45
    %s47 = sld [smem:[#allocation2 + $0x2]]
    %s48 = scalar_lea.vmem [#allocation6], 2
    %v49 = vld [vmem:[%s48] sm:$0x1]
    %v50 = vstv %s47
    %v51 = vmul.f32 %v50, %v49
    %v52 = vadd.f32 %v46, %v51
    %s53 = sld [smem:[#allocation2 + $0x3]]
    %s54 = scalar_lea.vmem [#allocation6], 3
    %v55 = vld [vmem:[%s54] sm:$0x1]
    %v56 = vstv %s53
    %v57 = vmul.f32 %v56, %v55
    %v58 = vadd.f32 %v52, %v57
    %59 = vst [vmem:[#allocation7] sm:$0x1] %v58
    %s60 = sld [smem:[#allocation2 + $0x80]]
    %v61 = vld [vmem:[#allocation6] sm:$0x1]
    %v62 = vstv %s60
    %v63 = vmul.f32 %v62, %v61
    %s64 = sld [smem:[#allocation2 + $0x81]]
    %v65 = vld [vmem:[%s42] sm:$0x1]
    %v66 = vstv %s64
    %v67 = vmul.f32 %v66, %v65
    %v68 = vadd.f32 %v63, %v67
    %s69 = sld [smem:[#allocation2 + $0x82]]
    %v70 = vld [vmem:[%s48] sm:$0x1]
    %v71 = vstv %s69
    %v72 = vmul.f32 %v71, %v70
    %v73 = vadd.f32 %v68, %v72
    %s74 = sld [smem:[#allocation2 + $0x83]]
    %v75 = vld [vmem:[%s54] sm:$0x1]
    %v76 = vstv %s74
    %v77 = vmul.f32 %v76, %v75
    %v78 = vadd.f32 %v73, %v77
    %s79 = scalar_lea.vmem [#allocation7], 1
    %80 = vst [vmem:[%s79] sm:$0x1] %v78
    %s81 = sld [smem:[#allocation2 + $0x100]]
    %v82 = vld [vmem:[#allocation6] sm:$0x1]
    %v83 = vstv %s81
    %v84 = vmul.f32 %v83, %v82
    %s85 = sld [smem:[#allocation2 + $0x101]]
    %v86 = vld [vmem:[%s42] sm:$0x1]
    %v87 = vstv %s85
    %v88 = vmul.f32 %v87, %v86
    %v89 = vadd.f32 %v84, %v88
    %s90 = sld [smem:[#allocation2 + $0x102]]
    %v91 = vld [vmem:[%s48] sm:$0x1]
    %v92 = vstv %s90
    %v93 = vmul.f32 %v92, %v91
    %v94 = vadd.f32 %v89, %v93
    %s95 = sld [smem:[#allocation2 + $0x103]]
    %v96 = vld [vmem:[%s54] sm:$0x1]
    %v97 = vstv %s95
    %v98 = vmul.f32 %v97, %v96
    %v99 = vadd.f32 %v94, %v98
    %s100 = scalar_lea.vmem [#allocation7], 2
    %101 = vst [vmem:[%s100] sm:$0x1] %v99
    %s102 = sld [smem:[#allocation2 + $0x180]]
    %v103 = vld [vmem:[#allocation6] sm:$0x1]
    %v104 = vstv %s102
    %v105 = vmul.f32 %v104, %v103
    %s106 = sld [smem:[#allocation2 + $0x181]]
    %v107 = vld [vmem:[%s42] sm:$0x1]
    %v108 = vstv %s106
    %v109 = vmul.f32 %v108, %v107
    %v110 = vadd.f32 %v105, %v109
    %s111 = sld [smem:[#allocation2 + $0x182]]
    %v112 = vld [vmem:[%s48] sm:$0x1]
    %v113 = vstv %s111
    %v114 = vmul.f32 %v113, %v112
    %v115 = vadd.f32 %v110, %v114
    %s116 = sld [smem:[#allocation2 + $0x183]]
    %v117 = vld [vmem:[%s54] sm:$0x1]
    %v118 = vstv %s116
    %v119 = vmul.f32 %v118, %v117
    %v120 = vadd.f32 %v115, %v119
    %s121 = scalar_lea.vmem [#allocation7], 3
    %122 = vst [vmem:[%s121] sm:$0x1] %v120
    // Predicated region
    $region18: #{tpu_custom_call.1} parent=1 // pred_check
      _
    $region19: #{tpu_custom_call.1} parent=1 // pred_check_branch
      %124 = sbr.rel (0) target = $region21
    $region20: #{tpu_custom_call.1} parent=1 // pred_region
      %s126 = ssub.s32 64, 64
      %127 = vsyncadd [#allocation4], %s126
      %s128 = sshll.u32 [#allocation7], 4
      %s129 = int_to_ptr.vmem [resolvable:$true] %s128
      %134 = dma.vmem_to_hbm [thread:$0]  %s129, 64, %s2, [#allocation4], 16, 16, 1
    $region21: #{tpu_custom_call.1} parent=1 // pred_fallthru
      _
    // Predicated region
    $region22: #{tpu_custom_call.1} parent=1 // pred_check
      _
    $region23: #{tpu_custom_call.1} parent=1 // pred_check_branch
      %136 = sbr.rel (0) target = $region25
    $region24: #{tpu_custom_call.1} parent=1 // pred_region
      %137 = dma.done [#allocation4], 64
    $region25: #{tpu_custom_call.1} parent=1 // pred_fallthru
      _
    %138 = vsyncpa [#allocation3], 1
    %139 = vsyncpa [#allocation4], 1
    %140 = vsyncpa [#allocation5], 1

</llo_original>
